<compile_context>
chip_gen: v7x
topology: tpu7x:2x2x1
jax: 0.10.0
libtpu: 0.0.40
codegen_flags: <defaults>
</compile_context>

<pallas_src>
import jax
import jax.numpy as jnp
from jax import lax
from jax.experimental import pallas as pl
from jax.experimental.pallas import tpu as pltpu

BN_EPS = 1e-5
LANE = 128


def conv_stats_kernel(p_ref, w_ref, y_ref, s_ref, ss_ref):
    """Conv-as-matmul tile + per-tile per-channel sum / sumsq (from the f32 accumulator)."""
    y = jnp.dot(p_ref[...], w_ref[...], preferred_element_type=jnp.float32)  # (TM, TC) f32
    y_ref[...] = y.astype(y_ref.dtype)                                        # bf16 intermediate
    tc = y.shape[-1]
    s_ref[...] = jnp.sum(y, axis=0, keepdims=True).reshape(1, 1, tc)
    ss_ref[...] = jnp.sum(y * y, axis=0, keepdims=True).reshape(1, 1, tc)


def bn_relu_kernel(y_ref, scale_ref, shift_ref, o_ref):
    """Folded BN affine (single FMA) + ReLU on a lane-dense tile, all f32 math."""
    y = y_ref[...].astype(jnp.float32)
    o_ref[...] = jnp.maximum(y * scale_ref[...] + shift_ref[...], 0.0)


def conv_block_forward(x_nchw, weight, gamma, beta, stride=1, padding=1, tm=256):
    """ConvBlock forward: Conv2d(no bias) -> BatchNorm2d(train-mode stats) -> ReLU.

    x_nchw : (N, Cin, H, W)      weight : (Cout, Cin, KH, KW)   gamma/beta : (Cout,)
    """
    N, Cin, H, W = x_nchw.shape
    Cout, _, KH, KW = weight.shape

    # ---- glue: NCHW -> NHWC, spatial pad, im2col (bf16 halves HBM/VMEM traffic) ----
    x = jnp.transpose(x_nchw, (0, 2, 3, 1)).astype(jnp.bfloat16)               # (N, H, W, Cin)
    xp = jnp.pad(x, ((0, 0), (padding, padding), (padding, padding), (0, 0)))
    Ho = (H + 2 * padding - KH) // stride + 1
    Wo = (W + 2 * padding - KW) // stride + 1
    slabs = [xp[:, kh:kh + stride * Ho:stride, kw:kw + stride * Wo:stride, :]
             for kh in range(KH) for kw in range(KW)]
    patches = jnp.concatenate(slabs, axis=-1).reshape(N * Ho * Wo, KH * KW * Cin)

    M, K = patches.shape
    Kp = pl.cdiv(K, LANE) * LANE                      # pad contraction dim to 128 lanes
    tc = min(512, pl.cdiv(Cout, LANE) * LANE)         # output-channel tile (lane-dense)
    nc = pl.cdiv(Cout, tc)
    Cp = nc * tc                                      # padded output channels
    nt = pl.cdiv(M, tm)
    Mp = nt * tm                                      # pad rows to a multiple of the M tile

    patches_p = jnp.pad(patches, ((0, Mp - M), (0, Kp - K)))                   # zeros: inert
    wmat = jnp.transpose(weight, (2, 3, 1, 0)).reshape(K, Cout).astype(jnp.bfloat16)
    wmat_p = jnp.pad(wmat, ((0, Kp - K), (0, Cp - Cout)))

    # Explicit VMEM budget from the double-buffered working set of the larger pass.
    work = 2 * (tm * Kp * 2 + Kp * tc * 2 + tm * tc * 2 + 2 * tc * 4) + tm * tc * 4
    vmem_bytes = int(min(max(2 * work, 8 * 1024 * 1024), 48 * 1024 * 1024))
    cparams = pltpu.CompilerParams(dimension_semantics=("parallel", "parallel"),
                                   vmem_limit_bytes=vmem_bytes)

    # ---- pass 1: conv matmul + partial BN statistics ----
    y, psum, psumsq = pl.pallas_call(
        conv_stats_kernel,
        out_shape=(
            jax.ShapeDtypeStruct((Mp, Cp), jnp.bfloat16),
            jax.ShapeDtypeStruct((nt, 1, Cp), jnp.float32),
            jax.ShapeDtypeStruct((nt, 1, Cp), jnp.float32),
        ),
        grid=(nt, nc),
        in_specs=[
            pl.BlockSpec((tm, Kp), lambda i, j: (i, 0)),     # patch tile reused across j
            pl.BlockSpec((Kp, tc), lambda i, j: (0, j)),
        ],
        out_specs=(
            pl.BlockSpec((tm, tc), lambda i, j: (i, j)),
            pl.BlockSpec((1, 1, tc), lambda i, j: (i, 0, j)),
            pl.BlockSpec((1, 1, tc), lambda i, j: (i, 0, j)),
        ),
        compiler_params=cparams,
        cost_estimate=pl.CostEstimate(
            flops=2 * Mp * Kp * Cp, transcendentals=0,
            bytes_accessed=Mp * Kp * 2 + nt * Kp * Cp * 2 + Mp * Cp * 2 + 2 * nt * Cp * 4),
    )(patches_p, wmat_p)

    # ---- global BN statistics (padded rows are exactly zero -> contribute nothing) ----
    count = jnp.float32(M)                               # true N*Ho*Wo, not padded Mp
    sums = jnp.sum(psum[:, 0, :], axis=0)                # (Cp,)
    sumsq = jnp.sum(psumsq[:, 0, :], axis=0)             # (Cp,)
    mean = sums / count
    var = jnp.maximum(sumsq / count - mean * mean, 0.0)  # biased batch variance (f32)
    inv = lax.rsqrt(var + BN_EPS)
    gamma_p = jnp.pad(gamma.astype(jnp.float32), (0, Cp - Cout), constant_values=1.0)
    beta_p = jnp.pad(beta.astype(jnp.float32), (0, Cp - Cout))
    scale = (gamma_p * inv).reshape(1, Cp)
    shift = (beta_p - mean * gamma_p * inv).reshape(1, Cp)

    # ---- pass 2: folded BN affine + ReLU ----
    out_p = pl.pallas_call(
        bn_relu_kernel,
        out_shape=jax.ShapeDtypeStruct((Mp, Cp), jnp.float32),
        grid=(nt, nc),
        in_specs=[
            pl.BlockSpec((tm, tc), lambda i, j: (i, j)),
            pl.BlockSpec((1, tc), lambda i, j: (0, j)),
            pl.BlockSpec((1, tc), lambda i, j: (0, j)),
        ],
        out_specs=pl.BlockSpec((tm, tc), lambda i, j: (i, j)),
        compiler_params=cparams,
        cost_estimate=pl.CostEstimate(
            flops=3 * Mp * Cp, transcendentals=0,
            bytes_accessed=Mp * Cp * 2 + Mp * Cp * 4 + 2 * Cp * 4),
    )(y, scale, shift)

    out = out_p[:M, :Cout].reshape(N, Ho, Wo, Cout)
    return jnp.transpose(out, (0, 3, 1, 2)).astype(x_nchw.dtype)       # back to NCHW


def _reference_forward(x, weight, gamma, beta, stride=1, padding=1):
    """Plain-JAX reference (conv + train-mode BN + ReLU) with bf16-rounded operands so the
    comparison isolates kernel correctness from bf16 input quantization."""
    xb = x.astype(jnp.bfloat16).astype(jnp.float32)
    wb = weight.astype(jnp.bfloat16).astype(jnp.float32)
    y = lax.conv_general_dilated(
        xb, wb, window_strides=(stride, stride),
        padding=[(padding, padding), (padding, padding)],
        dimension_numbers=("NCHW", "OIHW", "NCHW"),
        precision=lax.Precision.HIGHEST,
    )
    mean = jnp.mean(y, axis=(0, 2, 3), keepdims=True)
    var = jnp.mean((y - mean) ** 2, axis=(0, 2, 3), keepdims=True)
    yn = (y - mean) * lax.rsqrt(var + BN_EPS)
    yn = yn * gamma.reshape(1, -1, 1, 1) + beta.reshape(1, -1, 1, 1)
    return jnp.maximum(yn, 0.0)


if __name__ == "__main__":
    # ConvBlock(in_channel=4, out_channel=8, kernel_size=3, stride=1, padding=1,
    #           norm_cfg={'type': 'BN'}, act_cfg={'type': 'Relu'})
    N, Cin, H, W = 2, 4, 16, 16
    Cout, KH, KW = 8, 3, 3

    key = jax.random.PRNGKey(0)
    kx, kw, kg, kb = jax.random.split(key, 4)
    x = jax.random.normal(kx, (N, Cin, H, W), dtype=jnp.float32)
    weight = jax.random.normal(kw, (Cout, Cin, KH, KW), dtype=jnp.float32) * 0.1
    gamma = 1.0 + 0.1 * jax.random.normal(kg, (Cout,), dtype=jnp.float32)
    beta = 0.1 * jax.random.normal(kb, (Cout,), dtype=jnp.float32)

    fwd = jax.jit(conv_block_forward, static_argnames=("stride", "padding", "tm"))
    out = jax.block_until_ready(fwd(x, weight, gamma, beta, stride=1, padding=1))

    ref = jax.block_until_ready(_reference_forward(x, weight, gamma, beta, 1, 1))
    assert out.shape == (N, Cout, H, W)
    assert jnp.allclose(out, ref, atol=5e-3, rtol=3e-3), "mismatch vs reference"

    print("KERNEL_OK")
</pallas_src>

<mosaic_0001>
module attributes {stable_mosaic.version = 11 : i64} {
  func.func @bn_relu_kernel(%arg0: i32, %arg1: i32, %arg2: memref<256x128xbf16, #tpu.memory_space<vmem>>, %arg3: memref<1x128xf32, #tpu.memory_space<vmem>>, %arg4: memref<1x128xf32, #tpu.memory_space<vmem>>, %arg5: memref<256x128xf32, #tpu.memory_space<vmem>>) attributes {dimension_semantics = [#tpu.dimension_semantics<parallel>, #tpu.dimension_semantics<parallel>], iteration_bounds = array<i64: 2, 1>, scalar_prefetch = 0 : i64, scratch_operands = 0 : i64, tpu.core_type = #tpu.core_type<tc>, window_params = [{transform_indices = @transform_0, window_bounds = array<i64: 256, 128>}, {transform_indices = @transform_1, window_bounds = array<i64: 1, 128>}, {transform_indices = @transform_2, window_bounds = array<i64: 1, 128>}, {transform_indices = @transform_3, window_bounds = array<i64: 256, 128>}]} {
    %c0 = arith.constant 0 : index
    %c0_0 = arith.constant 0 : index
    %0 = vector.load %arg2[%c0, %c0_0] : memref<256x128xbf16, #tpu.memory_space<vmem>>, vector<256x128xbf16>
    %1 = arith.extf %0 : vector<256x128xbf16> to vector<256x128xf32>
    %c0_1 = arith.constant 0 : index
    %c0_2 = arith.constant 0 : index
    %2 = vector.load %arg3[%c0_1, %c0_2] : memref<1x128xf32, #tpu.memory_space<vmem>>, vector<1x128xf32>
    %3 = vector.broadcast %2 : vector<1x128xf32> to vector<256x128xf32>
    %4 = arith.mulf %1, %3 : vector<256x128xf32>
    %c0_3 = arith.constant 0 : index
    %c0_4 = arith.constant 0 : index
    %5 = vector.load %arg4[%c0_3, %c0_4] : memref<1x128xf32, #tpu.memory_space<vmem>>, vector<1x128xf32>
    %6 = vector.broadcast %5 : vector<1x128xf32> to vector<256x128xf32>
    %7 = arith.addf %4, %6 : vector<256x128xf32>
    %cst = arith.constant 0.000000e+00 : f32
    %8 = vector.broadcast %cst : f32 to vector<256x128xf32>
    %9 = arith.maximumf %7, %8 : vector<256x128xf32>
    %c0_5 = arith.constant 0 : index
    %c0_6 = arith.constant 0 : index
    %10 = vector.load %arg5[%c0_5, %c0_6] : memref<256x128xf32, #tpu.memory_space<vmem>>, vector<256x128xf32>
    tpu.vector_store %arg5[%c0_5, %c0_6], %9 {strides = array<i32>} : memref<256x128xf32, #tpu.memory_space<vmem>>, vector<256x128xf32>,
    return
  }
  func.func @transform_0(%arg0: i32, %arg1: i32) -> (i32, i32) {
    %c0_i32 = arith.constant 0 : i32
    return %arg0, %arg1 : i32, i32
  }
  func.func @transform_1(%arg0: i32, %arg1: i32) -> (i32, i32) {
    %c0_i32 = arith.constant 0 : i32
    %c0_i32_0 = arith.constant 0 : i32
    return %c0_i32, %arg1 : i32, i32
  }
  func.func @transform_2(%arg0: i32, %arg1: i32) -> (i32, i32) {
    %c0_i32 = arith.constant 0 : i32
    %c0_i32_0 = arith.constant 0 : i32
    return %c0_i32, %arg1 : i32, i32
  }
  func.func @transform_3(%arg0: i32, %arg1: i32) -> (i32, i32) {
    %c0_i32 = arith.constant 0 : i32
    return %arg0, %arg1 : i32, i32
  }
}

module attributes {stable_mosaic.version = 11 : i64} {
  func.func @conv_stats_kernel(%arg0: i32, %arg1: i32, %arg2: memref<256x128xbf16, #tpu.memory_space<vmem>>, %arg3: memref<128x128xbf16, #tpu.memory_space<vmem>>, %arg4: memref<256x128xbf16, #tpu.memory_space<vmem>>, %arg5: memref<1x1x128xf32, #tpu.memory_space<vmem>>, %arg6: memref<1x1x128xf32, #tpu.memory_space<vmem>>) attributes {dimension_semantics = [#tpu.dimension_semantics<parallel>, #tpu.dimension_semantics<parallel>], iteration_bounds = array<i64: 2, 1>, scalar_prefetch = 0 : i64, scratch_operands = 0 : i64, tpu.core_type = #tpu.core_type<tc>, window_params = [{transform_indices = @transform_0, window_bounds = array<i64: 256, 128>}, {transform_indices = @transform_1, window_bounds = array<i64: 128, 128>}, {transform_indices = @transform_2, window_bounds = array<i64: 256, 128>}, {transform_indices = @transform_3, window_bounds = array<i64: 1, 1, 128>}, {transform_indices = @transform_4, window_bounds = array<i64: 1, 1, 128>}]} {
    %c0 = arith.constant 0 : index
    %c0_0 = arith.constant 0 : index
    %0 = vector.load %arg2[%c0, %c0_0] : memref<256x128xbf16, #tpu.memory_space<vmem>>, vector<256x128xbf16>
    %c0_1 = arith.constant 0 : index
    %c0_2 = arith.constant 0 : index
    %1 = vector.load %arg3[%c0_1, %c0_2] : memref<128x128xbf16, #tpu.memory_space<vmem>>, vector<128x128xbf16>
    %cst = arith.constant dense<0.000000e+00> : vector<256x128xf32>
    %2 = tpu.matmul %0, %1, %cst {dimension_numbers = #tpu.dot_dimension_numbers<[1], [0], [0], [1], [0, 0, 1, 1], [], []>} : vector<256x128xbf16>, vector<128x128xbf16>, vector<256x128xf32> -> vector<256x128xf32>
    %3 = arith.truncf %2 : vector<256x128xf32> to vector<256x128xbf16>
    %c0_3 = arith.constant 0 : index
    %c0_4 = arith.constant 0 : index
    %4 = vector.load %arg4[%c0_3, %c0_4] : memref<256x128xbf16, #tpu.memory_space<vmem>>, vector<256x128xbf16>
    tpu.vector_store %arg4[%c0_3, %c0_4], %3 {strides = array<i32>} : memref<256x128xbf16, #tpu.memory_space<vmem>>, vector<256x128xbf16>,
    %cst_5 = arith.constant dense<0.000000e+00> : vector<128xf32>
    %5 = vector.multi_reduction <add>, %2, %cst_5 [0] : vector<256x128xf32> to vector<128xf32>
    %6 = vector.shape_cast %5 : vector<128xf32> to vector<1x128xf32>
    %7 = vector.shape_cast %6 : vector<1x128xf32> to vector<1x1x128xf32>
    %c0_6 = arith.constant 0 : index
    %c0_7 = arith.constant 0 : index
    %c0_8 = arith.constant 0 : index
    %8 = vector.load %arg5[%c0_6, %c0_7, %c0_8] : memref<1x1x128xf32, #tpu.memory_space<vmem>>, vector<1x1x128xf32>
    tpu.vector_store %arg5[%c0_6, %c0_7, %c0_8], %7 {strides = array<i32>} : memref<1x1x128xf32, #tpu.memory_space<vmem>>, vector<1x1x128xf32>,
    %9 = arith.mulf %2, %2 : vector<256x128xf32>
    %cst_9 = arith.constant dense<0.000000e+00> : vector<128xf32>
    %10 = vector.multi_reduction <add>, %9, %cst_9 [0] : vector<256x128xf32> to vector<128xf32>
    %11 = vector.shape_cast %10 : vector<128xf32> to vector<1x128xf32>
    %12 = vector.shape_cast %11 : vector<1x128xf32> to vector<1x1x128xf32>
    %c0_10 = arith.constant 0 : index
    %c0_11 = arith.constant 0 : index
    %c0_12 = arith.constant 0 : index
    %13 = vector.load %arg6[%c0_10, %c0_11, %c0_12] : memref<1x1x128xf32, #tpu.memory_space<vmem>>, vector<1x1x128xf32>
    tpu.vector_store %arg6[%c0_10, %c0_11, %c0_12], %12 {strides = array<i32>} : memref<1x1x128xf32, #tpu.memory_space<vmem>>, vector<1x1x128xf32>,
    return
  }
  func.func @transform_0(%arg0: i32, %arg1: i32) -> (i32, i32) {
    %c0_i32 = arith.constant 0 : i32
    %c0_i32_0 = arith.constant 0 : i32
    return %arg0, %c0_i32 : i32, i32
  }
  func.func @transform_1(%arg0: i32, %arg1: i32) -> (i32, i32) {
    %c0_i32 = arith.constant 0 : i32
    %c0_i32_0 = arith.constant 0 : i32
    return %c0_i32, %arg1 : i32, i32
  }
  func.func @transform_2(%arg0: i32, %arg1: i32) -> (i32, i32) {
    %c0_i32 = arith.constant 0 : i32
    return %arg0, %arg1 : i32, i32
  }
  func.func @transform_3(%arg0: i32, %arg1: i32) -> (i32, i32, i32) {
    %c0_i32 = arith.constant 0 : i32
    %c0_i32_0 = arith.constant 0 : i32
    return %arg0, %c0_i32, %arg1 : i32, i32, i32
  }
  func.func @transform_4(%arg0: i32, %arg1: i32) -> (i32, i32, i32) {
    %c0_i32 = arith.constant 0 : i32
    %c0_i32_0 = arith.constant 0 : i32
    return %arg0, %c0_i32, %arg1 : i32, i32, i32
  }
}

</mosaic_0001>

<llo_original>
// kernel: conv_block_forward.3
$region0: #{conv_block_forward.3}
  #allocation0 [shape = 'u32[]', space=smem, size = 0x4, offset = 0x4, fixed_abs, tag = 'smem constant byte address 0x4 - core index']
  #allocation1 [shape = 'u32[144,128]{1,0:T(1,128)}', space=vmem, size = 0x12000, scoped, tag = 'internal scratch']
  %s0 = inlined_call_operand.vmem [shape: bf16[512,128], index: 0, kind: input, shape index: {}]
  %s1 = inlined_call_operand.vmem [shape: f32[1,128], index: 1, kind: input, shape index: {}]
  %s2 = inlined_call_operand.vmem [shape: f32[1,128], index: 2, kind: input, shape index: {}]
  %s3 = inlined_call_operand.vmem [shape: f32[512,128], index: 3, kind: output, shape index: {}]
  %s4 = sld [smem:[#allocation0]]
  $region45: #{conv_block_forward.3} parent=0
    _
  %s6 = ssub.s32 1, %s4
  %s7 = scalar_select 0, %s6, %s4
  loop: start=0, step=1, limit=4
  $region2: #{conv_block_forward.3} parent=0 // loop_pre_header
    _
  $region3: #{conv_block_forward.3} parent=0 // loop_header
    %s9 = sphi 0, %s13
    %p10 = scmp.ge.s32.totalorder %s9, 4
    %s16 = sphi 0, %s28
    %s17 = sphi 0, %s24
    %s18 = sphi 0, %s16
    %s19 = sphi 0, %s17
    %s20 = sphi 0, %s18
    %s21 = sphi 0, %s19
    %s33 = sphi 0, %s35
    %s36 = sphi 0, %s33
    %s37 = sphi 0, %s36
    %s53 = sphi 0, %s37
    %s59 = sphi 0, %s61
    %s62 = sphi 0, %s59
    %s63 = sphi 0, %s62
    %s79 = sphi 0, %s63
    %s85 = sphi 0, %s87
    %s88 = sphi 0, %s85
    %s89 = sphi 0, %s88
    %s105 = sphi 0, %s89
    %s113 = sphi 0, %s115
    %s116 = sphi 0, %s113
    %s117 = sphi 0, %s116
    %s133 = sphi 0, %s117
  $region4: #{conv_block_forward.3} parent=0 // loop_header_branch
    %12 = sbr.rel (%p10) target = $region8
  $region5: #{conv_block_forward.3} parent=0 // loop_body
    %s14 = ssub.s32 %s9, 1
    %s15 = ssub.s32 %s9, 2
    %s22 = sadd.s32 1, %s17
    %p23 = scmp.ge.s32.totalorder %s22, 1
    %s24 = scalar_select %p23, 0, %s22
    %s25 = sadd.s32 1, %s16
    %s26 = scalar_select %p23, %s25, %s16
    %p27 = scmp.ge.s32.totalorder %s26, 2
    %s28 = scalar_select %p27, 0, %s26
    %s29 = ssub.s32 %s16, %s28
    %s30 = ssub.s32 %s17, %s24
    %s31 = sor.u32 %s29, %s30
    %p32 = scmp.eq.s32.totalorder %s31, 0
    %s34 = sadd.s32 %s33, 1
    %s35 = scalar_select %p32, %s33, %s34
    %p38 = pneg %p32
    %p39 = scmp.eq.s32.totalorder %s9, 1
    %p40 = por %p38, %p39
    %p41 = scmp.ne.s32.totalorder %s33, %s36
    %p42 = scmp.eq.s32.totalorder %s9, 0
    %p43 = por %p41, %p42
    %p44 = scmp.ne.s32.totalorder %s33, %s36
    %p45 = scmp.eq.s32.totalorder %s14, 1
    %p46 = por %p44, %p45
    %p47 = scmp.ne.s32.totalorder %s36, %s37
    %p48 = scmp.eq.s32.totalorder %s14, 0
    %p49 = por %p47, %p48
    %p50 = scmp.ne.s32.totalorder %s36, %s37
    %p51 = scmp.eq.s32.totalorder %s15, 1
    %p52 = por %p50, %p51
    %p54 = scmp.ne.s32.totalorder %s37, %s53
    %p55 = scmp.eq.s32.totalorder %s15, 0
    %p56 = por %p54, %p55
    %s57 = ssub.s32 %s17, %s24
    %p58 = scmp.eq.s32.totalorder %s57, 0
    %s60 = sadd.s32 %s59, 1
    %s61 = scalar_select %p58, %s59, %s60
    %p64 = pneg %p58
    %p65 = scmp.eq.s32.totalorder %s9, 1
    %p66 = por %p64, %p65
    %p67 = scmp.ne.s32.totalorder %s59, %s62
    %p68 = scmp.eq.s32.totalorder %s9, 0
    %p69 = por %p67, %p68
    %p70 = scmp.ne.s32.totalorder %s59, %s62
    %p71 = scmp.eq.s32.totalorder %s14, 1
    %p72 = por %p70, %p71
    %p73 = scmp.ne.s32.totalorder %s62, %s63
    %p74 = scmp.eq.s32.totalorder %s14, 0
    %p75 = por %p73, %p74
    %p76 = scmp.ne.s32.totalorder %s62, %s63
    %p77 = scmp.eq.s32.totalorder %s15, 1
    %p78 = por %p76, %p77
    %p80 = scmp.ne.s32.totalorder %s63, %s79
    %p81 = scmp.eq.s32.totalorder %s15, 0
    %p82 = por %p80, %p81
    %s83 = ssub.s32 %s17, %s24
    %p84 = scmp.eq.s32.totalorder %s83, 0
    %s86 = sadd.s32 %s85, 1
    %s87 = scalar_select %p84, %s85, %s86
    %p90 = pneg %p84
    %p91 = scmp.eq.s32.totalorder %s9, 1
    %p92 = por %p90, %p91
    %p93 = scmp.ne.s32.totalorder %s85, %s88
    %p94 = scmp.eq.s32.totalorder %s9, 0
    %p95 = por %p93, %p94
    %p96 = scmp.ne.s32.totalorder %s85, %s88
    %p97 = scmp.eq.s32.totalorder %s14, 1
    %p98 = por %p96, %p97
    %p99 = scmp.ne.s32.totalorder %s88, %s89
    %p100 = scmp.eq.s32.totalorder %s14, 0
    %p101 = por %p99, %p100
    %p102 = scmp.ne.s32.totalorder %s88, %s89
    %p103 = scmp.eq.s32.totalorder %s15, 1
    %p104 = por %p102, %p103
    %p106 = scmp.ne.s32.totalorder %s89, %s105
    %p107 = scmp.eq.s32.totalorder %s15, 0
    %p108 = por %p106, %p107
    %s109 = ssub.s32 %s16, %s28
    %s110 = ssub.s32 %s17, %s24
    %s111 = sor.u32 %s109, %s110
    %p112 = scmp.eq.s32.totalorder %s111, 0
    %s114 = sadd.s32 %s113, 1
    %s115 = scalar_select %p112, %s113, %s114
    %p118 = pneg %p112
    %p119 = scmp.eq.s32.totalorder %s9, 1
    %p120 = por %p118, %p119
    %p121 = scmp.ne.s32.totalorder %s113, %s116
    %p122 = scmp.eq.s32.totalorder %s9, 0
    %p123 = por %p121, %p122
    %p124 = scmp.ne.s32.totalorder %s113, %s116
    %p125 = scmp.eq.s32.totalorder %s14, 1
    %p126 = por %p124, %p125
    %p127 = scmp.ne.s32.totalorder %s116, %s117
    %p128 = scmp.eq.s32.totalorder %s14, 0
    %p129 = por %p127, %p128
    %p130 = scmp.ne.s32.totalorder %s116, %s117
    %p131 = scmp.eq.s32.totalorder %s15, 1
    %p132 = por %p130, %p131
    %p134 = scmp.ne.s32.totalorder %s117, %s133
    %p135 = scmp.eq.s32.totalorder %s15, 0
    %p136 = por %p134, %p135
    %p137 = scmp.le.s32.totalorder 1, %s9
    %p138 = scmp.lt.s32.totalorder %s9, 3
    %p139 = pnand %p137, %p138
    %p140 = pneg %p139
    // Predicated region
    $region9: #{conv_block_forward.3} parent=5 // pred_check
      _
    $region10: #{conv_block_forward.3} parent=5 // pred_check_branch
      %142 = sbr.rel (%p139) target = $region12
    $region11: #{conv_block_forward.3} parent=5 // pred_region
      %s143 = ssub.s32 %s9, 1
      // Predicated region
      $region13: #{conv_block_forward.3} parent=11 // pred_check
        %p144 = pneg %p75
      $region14: #{conv_block_forward.3} parent=11 // pred_check_branch
        %146 = sbr.rel (%p144) target = $region16
      $region15: #{conv_block_forward.3} parent=11 // pred_region
        %p147 = scmp.lt.s32.totalorder %s19, 0
        %s148 = scalar_select %p147, %s19, 0
        %s149 = scalar_lea.vmem %s1, %s148
      $region16: #{conv_block_forward.3} parent=11 // pred_fallthru
        _
      // Predicated region
      $region17: #{conv_block_forward.3} parent=11 // pred_check
        %p150 = pneg %p101
      $region18: #{conv_block_forward.3} parent=11 // pred_check_branch
        %152 = sbr.rel (%p150) target = $region20
      $region19: #{conv_block_forward.3} parent=11 // pred_region
        %p153 = scmp.lt.s32.totalorder %s19, 0
        %s154 = scalar_select %p153, %s19, 0
        %s155 = scalar_lea.vmem %s2, %s154
      $region20: #{conv_block_forward.3} parent=11 // pred_fallthru
        _
    $region12: #{conv_block_forward.3} parent=5 // pred_fallthru
      _
    %p156 = scmp.lt.s32.totalorder %s9, 2
    // Predicated region
    $region21: #{conv_block_forward.3} parent=5 // pred_check
      %p157 = pneg %p156
    $region22: #{conv_block_forward.3} parent=5 // pred_check_branch
      %159 = sbr.rel (%p157) target = $region24
    $region23: #{conv_block_forward.3} parent=5 // pred_region
      // Predicated region
      $region25: #{conv_block_forward.3} parent=23 // pred_check
        %p160 = pneg %p43
      $region26: #{conv_block_forward.3} parent=23 // pred_check_branch
        %162 = sbr.rel (%p160) target = $region28
      $region27: #{conv_block_forward.3} parent=23 // pred_region
        %s163 = smul.u32 32, %s16
        %p164 = scmp.lt.s32.totalorder %s163, 63
        %s165 = scalar_select %p164, %s163, 63
        %p166 = scmp.lt.s32.totalorder %s17, 0
        %s167 = scalar_select %p166, %s17, 0
        %s168 = sadd.s32 %s167, %s165
        %s169 = smul.addr %s168, 4
        %s170 = scalar_lea.vmem %s0, %s169
        %s171 = smul.u32 32, %s16
      $region28: #{conv_block_forward.3} parent=23 // pred_fallthru
        _
    $region24: #{conv_block_forward.3} parent=5 // pred_fallthru
      _
    %p172 = scmp.le.s32.totalorder 1, %s9
    %p173 = scmp.lt.s32.totalorder %s9, 3
    %p174 = pnand %p172, %p173
    %p175 = pneg %p174
    // Predicated region
    $region29: #{conv_block_forward.3} parent=5 // pred_check
      _
    $region30: #{conv_block_forward.3} parent=5 // pred_check_branch
      %177 = sbr.rel (%p174) target = $region32
    $region31: #{conv_block_forward.3} parent=5 // pred_region
      %s178 = ssub.s32 %s9, 1
      %s179 = smul.u32 32, %s18
      %p180 = scmp.lt.s32.totalorder %s179, 63
      %s181 = scalar_select %p180, %s179, 63
      %p182 = scmp.lt.s32.totalorder %s19, 0
      %s183 = scalar_select %p182, %s19, 0
      %s184 = sadd.s32 %s183, %s181
      %s185 = smul.addr %s184, 4
      %s186 = scalar_lea.vmem %s0, %s185
      %p187 = pneg %p49
      %p188 = pneg %p46
      %p189 = scmp.lt.s32.totalorder %s19, 0
      %s190 = scalar_select %p189, %s19, 0
      %s191 = scalar_lea.vmem %s1, %s190
      %p192 = pneg %p75
      %p193 = pneg %p72
      %p194 = scmp.lt.s32.totalorder %s19, 0
      %s195 = scalar_select %p194, %s19, 0
      %s196 = scalar_lea.vmem %s2, %s195
      %p197 = pneg %p101
      %p198 = pneg %p98
      %p199 = pneg %p129
      %p200 = pneg %p126
      %s201 = smul.u32 32, %s18
      %p202 = scmp.lt.s32.totalorder %s201, 63
      %s203 = scalar_select %p202, %s201, 63
      %p204 = scmp.lt.s32.totalorder %s19, 0
      %s205 = scalar_select %p204, %s19, 0
      %s206 = sadd.s32 %s205, %s203
      %s207 = smul.addr %s206, 8
      %s208 = scalar_lea.vmem %s3, %s207
      %s209 = smul.u32 32, %s18
      %p210 = scmp.lt.s32.totalorder %s209, 63
      %s211 = scalar_select %p210, %s209, 63
      %p212 = scmp.lt.s32.totalorder %s19, 0
      %s213 = scalar_select %p212, %s19, 0
      %s214 = sadd.s32 %s213, %s211
      %s215 = smul.addr %s214, 4
      %s216 = scalar_lea.vmem %s0, %s215
      %s217 = smul.u32 32, %s18
      %p218 = scmp.lt.s32.totalorder %s19, 0
      %s219 = scalar_select %p218, %s19, 0
      %s220 = scalar_lea.vmem %s1, %s219
      %p221 = scmp.lt.s32.totalorder %s19, 0
      %s222 = scalar_select %p221, %s19, 0
      %s223 = scalar_lea.vmem %s2, %s222
      %s224 = smul.u32 32, %s18
      %p225 = scmp.lt.s32.totalorder %s224, 63
      %s226 = scalar_select %p225, %s224, 63
      %p227 = scmp.lt.s32.totalorder %s19, 0
      %s228 = scalar_select %p227, %s19, 0
      %s229 = sadd.s32 %s228, %s226
      %s230 = smul.addr %s229, 8
      %s231 = scalar_lea.vmem %s3, %s230
      %s232 = smul.u32 32, %s18
      %v233 = vld [vmem:[%s216] sm:$0xf]
      %v234 = vld [vmem:[%s216 + $0x4] sm:$0xf]
      %v235 = vld [vmem:[%s216 + $0x8] sm:$0xf]
      %v236 = vld [vmem:[%s216 + $0xc] sm:$0xf]
      %v237 = vld [vmem:[%s216 + $0x10] sm:$0xf]
      %v238 = vld [vmem:[%s216 + $0x14] sm:$0xf]
      %v239 = vld [vmem:[%s216 + $0x18] sm:$0xf]
      %v240 = vld [vmem:[%s216 + $0x1c] sm:$0xf]
      %v241 = vld [vmem:[%s216 + $0x20] sm:$0xf]
      %v242 = vld [vmem:[%s216 + $0x24] sm:$0xf]
      %v243 = vld [vmem:[%s216 + $0x28] sm:$0xf]
      %v244 = vld [vmem:[%s216 + $0x2c] sm:$0xf]
      %v245 = vld [vmem:[%s216 + $0x30] sm:$0xf]
      %v246 = vld [vmem:[%s216 + $0x34] sm:$0xf]
      %v247 = vld [vmem:[%s216 + $0x38] sm:$0xf]
      %v248 = vld [vmem:[%s216 + $0x3c] sm:$0xf]
      %v249 = vld [vmem:[%s216 + $0x40] sm:$0xf]
      %v250 = vld [vmem:[%s216 + $0x44] sm:$0xf]
      %v251 = vld [vmem:[%s216 + $0x48] sm:$0xf]
      %v252 = vld [vmem:[%s216 + $0x4c] sm:$0xf]
      %v253 = vld [vmem:[%s216 + $0x50] sm:$0xf]
      %v254 = vld [vmem:[%s216 + $0x54] sm:$0xf]
      %v255 = vld [vmem:[%s216 + $0x58] sm:$0xf]
      %v256 = vld [vmem:[%s216 + $0x5c] sm:$0xf]
      %v257 = vld [vmem:[%s216 + $0x60] sm:$0xf]
      %v258 = vld [vmem:[%s216 + $0x64] sm:$0xf]
      %v259 = vld [vmem:[%s216 + $0x68] sm:$0xf]
      %v260 = vld [vmem:[%s216 + $0x6c] sm:$0xf]
      %v261 = vld [vmem:[%s216 + $0x70] sm:$0xf]
      %v262 = vld [vmem:[%s216 + $0x74] sm:$0xf]
      %v263 = vld [vmem:[%s216 + $0x78] sm:$0xf]
      %v264 = vld [vmem:[%s216 + $0x7c] sm:$0xf]
      %v265 = vunpack.c.l.bf16 %v233
      %v266 = vunpack.c.l.bf16 %v234
      %v267 = vunpack.c.l.bf16 %v235
      %v268 = vunpack.c.l.bf16 %v236
      %v269 = vunpack.c.l.bf16 %v237
      %v270 = vunpack.c.l.bf16 %v238
      %v271 = vunpack.c.l.bf16 %v239
      %v272 = vunpack.c.l.bf16 %v240
      %v273 = vunpack.c.l.bf16 %v241
      %v274 = vunpack.c.l.bf16 %v242
      %v275 = vunpack.c.l.bf16 %v243
      %v276 = vunpack.c.l.bf16 %v244
      %v277 = vunpack.c.l.bf16 %v245
      %v278 = vunpack.c.l.bf16 %v246
      %v279 = vunpack.c.l.bf16 %v247
      %v280 = vunpack.c.l.bf16 %v248
      %v281 = vunpack.c.l.bf16 %v249
      %v282 = vunpack.c.l.bf16 %v250
      %v283 = vunpack.c.l.bf16 %v251
      %v284 = vunpack.c.l.bf16 %v252
      %v285 = vunpack.c.l.bf16 %v253
      %v286 = vunpack.c.l.bf16 %v254
      %v287 = vunpack.c.l.bf16 %v255
      %v288 = vunpack.c.l.bf16 %v256
      %v289 = vunpack.c.l.bf16 %v257
      %v290 = vunpack.c.l.bf16 %v258
      %v291 = vunpack.c.l.bf16 %v259
      %v292 = vunpack.c.l.bf16 %v260
      %v293 = vunpack.c.l.bf16 %v261
      %v294 = vunpack.c.l.bf16 %v262
      %v295 = vunpack.c.l.bf16 %v263
      %v296 = vunpack.c.l.bf16 %v264
      %v297 = vld [vmem:[%s220] sm:$0x1]
      %v299 = vlaneseq
      %v300 = vshrl.u32 %v299, 7
      %v301 = vsub.s32 0, %v300
      %v302 = vrot.slane %v297, %v301
      %v304 = vmul.f32 %v265, %v302
      %v305 = vmul.f32 %v266, %v302
      %v306 = vmul.f32 %v267, %v302
      %v307 = vmul.f32 %v268, %v302
      %v308 = vmul.f32 %v269, %v302
      %v309 = vmul.f32 %v270, %v302
      %v310 = vmul.f32 %v271, %v302
      %v311 = vmul.f32 %v272, %v302
      %v312 = vmul.f32 %v273, %v302
      %v313 = vmul.f32 %v274, %v302
      %v314 = vmul.f32 %v275, %v302
      %v315 = vmul.f32 %v276, %v302
      %v316 = vmul.f32 %v277, %v302
      %v317 = vmul.f32 %v278, %v302
      %v318 = vmul.f32 %v279, %v302
      %v319 = vmul.f32 %v280, %v302
      %v320 = vmul.f32 %v281, %v302
      %v321 = vmul.f32 %v282, %v302
      %v322 = vmul.f32 %v283, %v302
      %v323 = vmul.f32 %v284, %v302
      %v324 = vmul.f32 %v285, %v302
      %v325 = vmul.f32 %v286, %v302
      %v326 = vmul.f32 %v287, %v302
      %v327 = vmul.f32 %v288, %v302
      %v328 = vmul.f32 %v289, %v302
      %v329 = vmul.f32 %v290, %v302
      %v330 = vmul.f32 %v291, %v302
      %v331 = vmul.f32 %v292, %v302
      %v332 = vmul.f32 %v293, %v302
      %v333 = vmul.f32 %v294, %v302
      %v334 = vmul.f32 %v295, %v302
      %v335 = vmul.f32 %v296, %v302
      %v336 = vld [vmem:[%s223] sm:$0x1]
      %v338 = vlaneseq
      %v339 = vshrl.u32 %v338, 7
      %v340 = vsub.s32 0, %v339
      %v341 = vrot.slane %v336, %v340
      %v343 = vadd.f32 %v304, %v341
      %v344 = vadd.f32 %v305, %v341
      %v345 = vadd.f32 %v306, %v341
      %v346 = vadd.f32 %v307, %v341
      %v347 = vadd.f32 %v308, %v341
      %v348 = vadd.f32 %v309, %v341
      %v349 = vadd.f32 %v310, %v341
      %v350 = vadd.f32 %v311, %v341
      %v351 = vadd.f32 %v312, %v341
      %v352 = vadd.f32 %v313, %v341
      %v353 = vadd.f32 %v314, %v341
      %v354 = vadd.f32 %v315, %v341
      %v355 = vadd.f32 %v316, %v341
      %v356 = vadd.f32 %v317, %v341
      %v357 = vadd.f32 %v318, %v341
      %v358 = vadd.f32 %v319, %v341
      %v359 = vadd.f32 %v320, %v341
      %v360 = vadd.f32 %v321, %v341
      %v361 = vadd.f32 %v322, %v341
      %v362 = vadd.f32 %v323, %v341
      %v363 = vadd.f32 %v324, %v341
      %v364 = vadd.f32 %v325, %v341
      %v365 = vadd.f32 %v326, %v341
      %v366 = vadd.f32 %v327, %v341
      %v367 = vadd.f32 %v328, %v341
      %v368 = vadd.f32 %v329, %v341
      %v369 = vadd.f32 %v330, %v341
      %v370 = vadd.f32 %v331, %v341
      %v371 = vadd.f32 %v332, %v341
      %v372 = vadd.f32 %v333, %v341
      %v373 = vadd.f32 %v334, %v341
      %v374 = vadd.f32 %v335, %v341
      %v375 = vmax.f32 %v343, 0.0
      %v376 = vmax.f32 %v344, 0.0
      %v377 = vmax.f32 %v345, 0.0
      %v378 = vmax.f32 %v346, 0.0
      %v379 = vmax.f32 %v347, 0.0
      %v380 = vmax.f32 %v348, 0.0
      %v381 = vmax.f32 %v349, 0.0
      %v382 = vmax.f32 %v350, 0.0
      %v383 = vmax.f32 %v351, 0.0
      %v384 = vmax.f32 %v352, 0.0
      %v385 = vmax.f32 %v353, 0.0
      %v386 = vmax.f32 %v354, 0.0
      %v387 = vmax.f32 %v355, 0.0
      %v388 = vmax.f32 %v356, 0.0
      %v389 = vmax.f32 %v357, 0.0
      %v390 = vmax.f32 %v358, 0.0
      %v391 = vmax.f32 %v359, 0.0
      %v392 = vmax.f32 %v360, 0.0
      %v393 = vmax.f32 %v361, 0.0
      %v394 = vmax.f32 %v362, 0.0
      %v395 = vmax.f32 %v363, 0.0
      %v396 = vmax.f32 %v364, 0.0
      %v397 = vmax.f32 %v365, 0.0
      %v398 = vmax.f32 %v366, 0.0
      %v399 = vmax.f32 %v367, 0.0
      %v400 = vmax.f32 %v368, 0.0
      %v401 = vmax.f32 %v369, 0.0
      %v402 = vmax.f32 %v370, 0.0
      %v403 = vmax.f32 %v371, 0.0
      %v404 = vmax.f32 %v372, 0.0
      %v405 = vmax.f32 %v373, 0.0
      %v406 = vmax.f32 %v374, 0.0
      %407 = vst [vmem:[%s231] sm:$0xff] %v375
      %408 = vst [vmem:[%s231 + $0x8] sm:$0xff] %v376
      %409 = vst [vmem:[%s231 + $0x10] sm:$0xff] %v377
      %410 = vst [vmem:[%s231 + $0x18] sm:$0xff] %v378
      %411 = vst [vmem:[%s231 + $0x20] sm:$0xff] %v379
      %412 = vst [vmem:[%s231 + $0x28] sm:$0xff] %v380
      %413 = vst [vmem:[%s231 + $0x30] sm:$0xff] %v381
      %414 = vst [vmem:[%s231 + $0x38] sm:$0xff] %v382
      %415 = vst [vmem:[%s231 + $0x40] sm:$0xff] %v383
      %416 = vst [vmem:[%s231 + $0x48] sm:$0xff] %v384
      %417 = vst [vmem:[%s231 + $0x50] sm:$0xff] %v385
      %418 = vst [vmem:[%s231 + $0x58] sm:$0xff] %v386
      %419 = vst [vmem:[%s231 + $0x60] sm:$0xff] %v387
      %420 = vst [vmem:[%s231 + $0x68] sm:$0xff] %v388
      %421 = vst [vmem:[%s231 + $0x70] sm:$0xff] %v389
      %422 = vst [vmem:[%s231 + $0x78] sm:$0xff] %v390
      %423 = vst [vmem:[%s231 + $0x80] sm:$0xff] %v391
      %424 = vst [vmem:[%s231 + $0x88] sm:$0xff] %v392
      %425 = vst [vmem:[%s231 + $0x90] sm:$0xff] %v393
      %426 = vst [vmem:[%s231 + $0x98] sm:$0xff] %v394
      %427 = vst [vmem:[%s231 + $0xa0] sm:$0xff] %v395
      %428 = vst [vmem:[%s231 + $0xa8] sm:$0xff] %v396
      %429 = vst [vmem:[%s231 + $0xb0] sm:$0xff] %v397
      %430 = vst [vmem:[%s231 + $0xb8] sm:$0xff] %v398
      %431 = vst [vmem:[%s231 + $0xc0] sm:$0xff] %v399
      %432 = vst [vmem:[%s231 + $0xc8] sm:$0xff] %v400
      %433 = vst [vmem:[%s231 + $0xd0] sm:$0xff] %v401
      %434 = vst [vmem:[%s231 + $0xd8] sm:$0xff] %v402
      %435 = vst [vmem:[%s231 + $0xe0] sm:$0xff] %v403
      %436 = vst [vmem:[%s231 + $0xe8] sm:$0xff] %v404
      %437 = vst [vmem:[%s231 + $0xf0] sm:$0xff] %v405
      %438 = vst [vmem:[%s231 + $0xf8] sm:$0xff] %v406
      %s439 = smul.u32 32, %s18
      %p440 = scmp.lt.s32.totalorder %s439, 63
      %s441 = scalar_select %p440, %s439, 63
      %p442 = scmp.lt.s32.totalorder %s19, 0
      %s443 = scalar_select %p442, %s19, 0
      %s444 = sadd.s32 %s443, %s441
      %s445 = smul.addr %s444, 8
      %s446 = scalar_lea.vmem %s3, %s445
      // Predicated region
      $region33: #{conv_block_forward.3} parent=31 // pred_check
        %p447 = pneg %p126
      $region34: #{conv_block_forward.3} parent=31 // pred_check_branch
        %449 = sbr.rel (%p447) target = $region36
      $region35: #{conv_block_forward.3} parent=31 // pred_region
        %s450 = smul.u32 32, %s18
      $region36: #{conv_block_forward.3} parent=31 // pred_fallthru
        _
    $region32: #{conv_block_forward.3} parent=5 // pred_fallthru
      _
    %p451 = scmp.le.s32.totalorder 2, %s9
    // Predicated region
    $region37: #{conv_block_forward.3} parent=5 // pred_check
      %p452 = pneg %p451
    $region38: #{conv_block_forward.3} parent=5 // pred_check_branch
      %454 = sbr.rel (%p452) target = $region40
    $region39: #{conv_block_forward.3} parent=5 // pred_region
      %s455 = ssub.s32 %s9, 2
      // Predicated region
      $region41: #{conv_block_forward.3} parent=39 // pred_check
        %p456 = pneg %p132
      $region42: #{conv_block_forward.3} parent=39 // pred_check_branch
        %458 = sbr.rel (%p456) target = $region44
      $region43: #{conv_block_forward.3} parent=39 // pred_region
        %s459 = smul.u32 32, %s20
        %p460 = scmp.lt.s32.totalorder %s459, 63
        %s461 = scalar_select %p460, %s459, 63
        %p462 = scmp.lt.s32.totalorder %s21, 0
        %s463 = scalar_select %p462, %s21, 0
        %s464 = sadd.s32 %s463, %s461
        %s465 = smul.addr %s464, 8
        %s466 = scalar_lea.vmem %s3, %s465
      $region44: #{conv_block_forward.3} parent=39 // pred_fallthru
        _
    $region40: #{conv_block_forward.3} parent=5 // pred_fallthru
      _
  $region6: #{conv_block_forward.3} parent=0 // loop_footer
    %s13 = sadd.s32 1, %s9
  $region7: #{conv_block_forward.3} parent=0 // loop_footer_branch
    %8 = sbr.rel target = $region3
  $region8: #{conv_block_forward.3} parent=0 // loop_exit
    _

// kernel: conv_block_forward.2
$region0: #{conv_block_forward.2}
  #allocation0 [shape = 'u32[]', space=smem, size = 0x4, offset = 0x4, fixed_abs, tag = 'smem constant byte address 0x4 - core index']
  #allocation1 [shape = 'u32[144,128]{1,0:T(1,128)}', space=vmem, size = 0x12000, scoped, tag = 'internal scratch']
  %s0 = inlined_call_operand.vmem [shape: bf16[512,128], index: 0, kind: input, shape index: {}]
  %s1 = inlined_call_operand.vmem [shape: bf16[128,128], index: 1, kind: input, shape index: {}]
  %s2 = inlined_call_operand.vmem [shape: bf16[512,128], index: 2, kind: output, shape index: {0}]
  %s3 = inlined_call_operand.vmem [shape: f32[2,1,128], index: 3, kind: output, shape index: {1}]
  %s4 = inlined_call_operand.vmem [shape: f32[2,1,128], index: 4, kind: output, shape index: {2}]
  %5 = xla_tuple %s2, %s3, %s4
  %s6 = sld [smem:[#allocation0]]
  $region57: #{conv_block_forward.2} parent=0
    _
  %s8 = ssub.s32 1, %s6
  %s9 = scalar_select 0, %s8, %s6
  loop: start=0, step=1, limit=4
  $region2: #{conv_block_forward.2} parent=0 // loop_pre_header
    _
  $region3: #{conv_block_forward.2} parent=0 // loop_header
    %s11 = sphi 0, %s15
    %p12 = scmp.ge.s32.totalorder %s11, 4
    %s18 = sphi 0, %s30
    %s19 = sphi 0, %s26
    %s20 = sphi 0, %s18
    %s21 = sphi 0, %s19
    %s22 = sphi 0, %s20
    %s23 = sphi 0, %s21
    %s33 = sphi 0, %s35
    %s36 = sphi 0, %s33
    %s37 = sphi 0, %s36
    %s53 = sphi 0, %s37
    %s59 = sphi 0, %s61
    %s62 = sphi 0, %s59
    %s63 = sphi 0, %s62
    %s79 = sphi 0, %s63
    %s87 = sphi 0, %s89
    %s90 = sphi 0, %s87
    %s91 = sphi 0, %s90
    %s107 = sphi 0, %s91
    %s115 = sphi 0, %s117
    %s118 = sphi 0, %s115
    %s119 = sphi 0, %s118
    %s135 = sphi 0, %s119
    %s143 = sphi 0, %s145
    %s146 = sphi 0, %s143
    %s147 = sphi 0, %s146
    %s163 = sphi 0, %s147
  $region4: #{conv_block_forward.2} parent=0 // loop_header_branch
    %14 = sbr.rel (%p12) target = $region8
  $region5: #{conv_block_forward.2} parent=0 // loop_body
    %s16 = ssub.s32 %s11, 1
    %s17 = ssub.s32 %s11, 2
    %s24 = sadd.s32 1, %s19
    %p25 = scmp.ge.s32.totalorder %s24, 1
    %s26 = scalar_select %p25, 0, %s24
    %s27 = sadd.s32 1, %s18
    %s28 = scalar_select %p25, %s27, %s18
    %p29 = scmp.ge.s32.totalorder %s28, 2
    %s30 = scalar_select %p29, 0, %s28
    %s31 = ssub.s32 %s18, %s30
    %p32 = scmp.eq.s32.totalorder %s31, 0
    %s34 = sadd.s32 %s33, 1
    %s35 = scalar_select %p32, %s33, %s34
    %p38 = pneg %p32
    %p39 = scmp.eq.s32.totalorder %s11, 1
    %p40 = por %p38, %p39
    %p41 = scmp.ne.s32.totalorder %s33, %s36
    %p42 = scmp.eq.s32.totalorder %s11, 0
    %p43 = por %p41, %p42
    %p44 = scmp.ne.s32.totalorder %s33, %s36
    %p45 = scmp.eq.s32.totalorder %s16, 1
    %p46 = por %p44, %p45
    %p47 = scmp.ne.s32.totalorder %s36, %s37
    %p48 = scmp.eq.s32.totalorder %s16, 0
    %p49 = por %p47, %p48
    %p50 = scmp.ne.s32.totalorder %s36, %s37
    %p51 = scmp.eq.s32.totalorder %s17, 1
    %p52 = por %p50, %p51
    %p54 = scmp.ne.s32.totalorder %s37, %s53
    %p55 = scmp.eq.s32.totalorder %s17, 0
    %p56 = por %p54, %p55
    %s57 = ssub.s32 %s19, %s26
    %p58 = scmp.eq.s32.totalorder %s57, 0
    %s60 = sadd.s32 %s59, 1
    %s61 = scalar_select %p58, %s59, %s60
    %p64 = pneg %p58
    %p65 = scmp.eq.s32.totalorder %s11, 1
    %p66 = por %p64, %p65
    %p67 = scmp.ne.s32.totalorder %s59, %s62
    %p68 = scmp.eq.s32.totalorder %s11, 0
    %p69 = por %p67, %p68
    %p70 = scmp.ne.s32.totalorder %s59, %s62
    %p71 = scmp.eq.s32.totalorder %s16, 1
    %p72 = por %p70, %p71
    %p73 = scmp.ne.s32.totalorder %s62, %s63
    %p74 = scmp.eq.s32.totalorder %s16, 0
    %p75 = por %p73, %p74
    %p76 = scmp.ne.s32.totalorder %s62, %s63
    %p77 = scmp.eq.s32.totalorder %s17, 1
    %p78 = por %p76, %p77
    %p80 = scmp.ne.s32.totalorder %s63, %s79
    %p81 = scmp.eq.s32.totalorder %s17, 0
    %p82 = por %p80, %p81
    %s83 = ssub.s32 %s18, %s30
    %s84 = ssub.s32 %s19, %s26
    %s85 = sor.u32 %s83, %s84
    %p86 = scmp.eq.s32.totalorder %s85, 0
    %s88 = sadd.s32 %s87, 1
    %s89 = scalar_select %p86, %s87, %s88
    %p92 = pneg %p86
    %p93 = scmp.eq.s32.totalorder %s11, 1
    %p94 = por %p92, %p93
    %p95 = scmp.ne.s32.totalorder %s87, %s90
    %p96 = scmp.eq.s32.totalorder %s11, 0
    %p97 = por %p95, %p96
    %p98 = scmp.ne.s32.totalorder %s87, %s90
    %p99 = scmp.eq.s32.totalorder %s16, 1
    %p100 = por %p98, %p99
    %p101 = scmp.ne.s32.totalorder %s90, %s91
    %p102 = scmp.eq.s32.totalorder %s16, 0
    %p103 = por %p101, %p102
    %p104 = scmp.ne.s32.totalorder %s90, %s91
    %p105 = scmp.eq.s32.totalorder %s17, 1
    %p106 = por %p104, %p105
    %p108 = scmp.ne.s32.totalorder %s91, %s107
    %p109 = scmp.eq.s32.totalorder %s17, 0
    %p110 = por %p108, %p109
    %s111 = ssub.s32 %s18, %s30
    %s112 = ssub.s32 %s19, %s26
    %s113 = sor.u32 %s111, %s112
    %p114 = scmp.eq.s32.totalorder %s113, 0
    %s116 = sadd.s32 %s115, 1
    %s117 = scalar_select %p114, %s115, %s116
    %p120 = pneg %p114
    %p121 = scmp.eq.s32.totalorder %s11, 1
    %p122 = por %p120, %p121
    %p123 = scmp.ne.s32.totalorder %s115, %s118
    %p124 = scmp.eq.s32.totalorder %s11, 0
    %p125 = por %p123, %p124
    %p126 = scmp.ne.s32.totalorder %s115, %s118
    %p127 = scmp.eq.s32.totalorder %s16, 1
    %p128 = por %p126, %p127
    %p129 = scmp.ne.s32.totalorder %s118, %s119
    %p130 = scmp.eq.s32.totalorder %s16, 0
    %p131 = por %p129, %p130
    %p132 = scmp.ne.s32.totalorder %s118, %s119
    %p133 = scmp.eq.s32.totalorder %s17, 1
    %p134 = por %p132, %p133
    %p136 = scmp.ne.s32.totalorder %s119, %s135
    %p137 = scmp.eq.s32.totalorder %s17, 0
    %p138 = por %p136, %p137
    %s139 = ssub.s32 %s18, %s30
    %s140 = ssub.s32 %s19, %s26
    %s141 = sor.u32 %s139, %s140
    %p142 = scmp.eq.s32.totalorder %s141, 0
    %s144 = sadd.s32 %s143, 1
    %s145 = scalar_select %p142, %s143, %s144
    %p148 = pneg %p142
    %p149 = scmp.eq.s32.totalorder %s11, 1
    %p150 = por %p148, %p149
    %p151 = scmp.ne.s32.totalorder %s143, %s146
    %p152 = scmp.eq.s32.totalorder %s11, 0
    %p153 = por %p151, %p152
    %p154 = scmp.ne.s32.totalorder %s143, %s146
    %p155 = scmp.eq.s32.totalorder %s16, 1
    %p156 = por %p154, %p155
    %p157 = scmp.ne.s32.totalorder %s146, %s147
    %p158 = scmp.eq.s32.totalorder %s16, 0
    %p159 = por %p157, %p158
    %p160 = scmp.ne.s32.totalorder %s146, %s147
    %p161 = scmp.eq.s32.totalorder %s17, 1
    %p162 = por %p160, %p161
    %p164 = scmp.ne.s32.totalorder %s147, %s163
    %p165 = scmp.eq.s32.totalorder %s17, 0
    %p166 = por %p164, %p165
    %p167 = scmp.le.s32.totalorder 1, %s11
    %p168 = scmp.lt.s32.totalorder %s11, 3
    %p169 = pnand %p167, %p168
    %p170 = pneg %p169
    // Predicated region
    $region9: #{conv_block_forward.2} parent=5 // pred_check
      _
    $region10: #{conv_block_forward.2} parent=5 // pred_check_branch
      %172 = sbr.rel (%p169) target = $region12
    $region11: #{conv_block_forward.2} parent=5 // pred_region
      %s173 = ssub.s32 %s11, 1
      // Predicated region
      $region13: #{conv_block_forward.2} parent=11 // pred_check
        %p174 = pneg %p75
      $region14: #{conv_block_forward.2} parent=11 // pred_check_branch
        %176 = sbr.rel (%p174) target = $region16
      $region15: #{conv_block_forward.2} parent=11 // pred_region
        %p177 = scmp.lt.s32.totalorder %s21, 0
        %s178 = scalar_select %p177, %s21, 0
        %s179 = smul.addr %s178, 4
        %s180 = scalar_lea.vmem %s1, %s179
      $region16: #{conv_block_forward.2} parent=11 // pred_fallthru
        _
    $region12: #{conv_block_forward.2} parent=5 // pred_fallthru
      _
    %p181 = scmp.lt.s32.totalorder %s11, 2
    // Predicated region
    $region17: #{conv_block_forward.2} parent=5 // pred_check
      %p182 = pneg %p181
    $region18: #{conv_block_forward.2} parent=5 // pred_check_branch
      %184 = sbr.rel (%p182) target = $region20
    $region19: #{conv_block_forward.2} parent=5 // pred_region
      // Predicated region
      $region21: #{conv_block_forward.2} parent=19 // pred_check
        %p185 = pneg %p43
      $region22: #{conv_block_forward.2} parent=19 // pred_check_branch
        %187 = sbr.rel (%p185) target = $region24
      $region23: #{conv_block_forward.2} parent=19 // pred_region
        %s188 = smul.u32 32, %s18
        %p189 = scmp.lt.s32.totalorder %s188, 63
        %s190 = scalar_select %p189, %s188, 63
        %s191 = smul.addr %s190, 4
        %s192 = scalar_lea.vmem %s0, %s191
        %s193 = smul.u32 32, %s18
      $region24: #{conv_block_forward.2} parent=19 // pred_fallthru
        _
    $region20: #{conv_block_forward.2} parent=5 // pred_fallthru
      _
    %p194 = scmp.le.s32.totalorder 1, %s11
    %p195 = scmp.lt.s32.totalorder %s11, 3
    %p196 = pnand %p194, %p195
    %p197 = pneg %p196
    // Predicated region
    $region25: #{conv_block_forward.2} parent=5 // pred_check
      _
    $region26: #{conv_block_forward.2} parent=5 // pred_check_branch
      %199 = sbr.rel (%p196) target = $region28
    $region27: #{conv_block_forward.2} parent=5 // pred_region
      %s200 = ssub.s32 %s11, 1
      %s201 = smul.u32 32, %s20
      %p202 = scmp.lt.s32.totalorder %s201, 63
      %s203 = scalar_select %p202, %s201, 63
      %s204 = smul.addr %s203, 4
      %s205 = scalar_lea.vmem %s0, %s204
      %p206 = pneg %p49
      %p207 = pneg %p46
      %p208 = scmp.lt.s32.totalorder %s21, 0
      %s209 = scalar_select %p208, %s21, 0
      %s210 = smul.addr %s209, 4
      %s211 = scalar_lea.vmem %s1, %s210
      %p212 = pneg %p75
      %p213 = pneg %p72
      %p214 = pneg %p103
      %p215 = pneg %p100
      %s216 = smul.u32 32, %s20
      %p217 = scmp.lt.s32.totalorder %s216, 63
      %s218 = scalar_select %p217, %s216, 63
      %p219 = scmp.lt.s32.totalorder %s21, 0
      %s220 = scalar_select %p219, %s21, 0
      %s221 = sadd.s32 %s220, %s218
      %s222 = smul.addr %s221, 4
      %s223 = scalar_lea.vmem %s2, %s222
      %p224 = pneg %p131
      %p225 = pneg %p128
      %p226 = scmp.lt.s32.totalorder %s20, 1
      %s227 = scalar_select %p226, %s20, 1
      %p228 = scmp.lt.s32.totalorder %s21, 0
      %s229 = scalar_select %p228, %s21, 0
      %s230 = sadd.s32 %s229, %s227
      %s231 = scalar_lea.vmem %s3, %s230
      %p232 = pneg %p159
      %p233 = pneg %p156
      %p234 = scmp.lt.s32.totalorder %s20, 1
      %s235 = scalar_select %p234, %s20, 1
      %p236 = scmp.lt.s32.totalorder %s21, 0
      %s237 = scalar_select %p236, %s21, 0
      %s238 = sadd.s32 %s237, %s235
      %s239 = scalar_lea.vmem %s4, %s238
      %s240 = smul.u32 32, %s20
      %p241 = scmp.lt.s32.totalorder %s240, 63
      %s242 = scalar_select %p241, %s240, 63
      %s243 = smul.addr %s242, 4
      %s244 = scalar_lea.vmem %s0, %s243
      %s245 = smul.u32 32, %s20
      %p246 = scmp.lt.s32.totalorder %s21, 0
      %s247 = scalar_select %p246, %s21, 0
      %s248 = smul.addr %s247, 4
      %s249 = scalar_lea.vmem %s1, %s248
      %s250 = smul.u32 32, %s20
      %p251 = scmp.lt.s32.totalorder %s250, 63
      %s252 = scalar_select %p251, %s250, 63
      %p253 = scmp.lt.s32.totalorder %s21, 0
      %s254 = scalar_select %p253, %s21, 0
      %s255 = sadd.s32 %s254, %s252
      %s256 = smul.addr %s255, 4
      %s257 = scalar_lea.vmem %s2, %s256
      %s258 = smul.u32 32, %s20
      %p259 = scmp.lt.s32.totalorder %s20, 1
      %s260 = scalar_select %p259, %s20, 1
      %p261 = scmp.lt.s32.totalorder %s21, 0
      %s262 = scalar_select %p261, %s21, 0
      %s263 = sadd.s32 %s262, %s260
      %s264 = scalar_lea.vmem %s3, %s263
      %p265 = scmp.lt.s32.totalorder %s20, 1
      %s266 = scalar_select %p265, %s20, 1
      %p267 = scmp.lt.s32.totalorder %s21, 0
      %s268 = scalar_select %p267, %s21, 0
      %s269 = sadd.s32 %s268, %s266
      %s270 = scalar_lea.vmem %s4, %s269
      %v272 = vld [vmem:[%s244] sm:$0xf]
      %v273 = vld [vmem:[%s244 + $0x4] sm:$0xf]
      %v274 = vld [vmem:[%s244 + $0x8] sm:$0xf]
      %v275 = vld [vmem:[%s244 + $0xc] sm:$0xf]
      %v276 = vld [vmem:[%s244 + $0x10] sm:$0xf]
      %v277 = vld [vmem:[%s244 + $0x14] sm:$0xf]
      %v278 = vld [vmem:[%s244 + $0x18] sm:$0xf]
      %v279 = vld [vmem:[%s244 + $0x1c] sm:$0xf]
      %v280 = vld [vmem:[%s244 + $0x20] sm:$0xf]
      %v281 = vld [vmem:[%s244 + $0x24] sm:$0xf]
      %v282 = vld [vmem:[%s244 + $0x28] sm:$0xf]
      %v283 = vld [vmem:[%s244 + $0x2c] sm:$0xf]
      %v284 = vld [vmem:[%s244 + $0x30] sm:$0xf]
      %v285 = vld [vmem:[%s244 + $0x34] sm:$0xf]
      %v286 = vld [vmem:[%s244 + $0x38] sm:$0xf]
      %v287 = vld [vmem:[%s244 + $0x3c] sm:$0xf]
      %v288 = vld [vmem:[%s244 + $0x40] sm:$0xf]
      %v289 = vld [vmem:[%s244 + $0x44] sm:$0xf]
      %v290 = vld [vmem:[%s244 + $0x48] sm:$0xf]
      %v291 = vld [vmem:[%s244 + $0x4c] sm:$0xf]
      %v292 = vld [vmem:[%s244 + $0x50] sm:$0xf]
      %v293 = vld [vmem:[%s244 + $0x54] sm:$0xf]
      %v294 = vld [vmem:[%s244 + $0x58] sm:$0xf]
      %v295 = vld [vmem:[%s244 + $0x5c] sm:$0xf]
      %v296 = vld [vmem:[%s244 + $0x60] sm:$0xf]
      %v297 = vld [vmem:[%s244 + $0x64] sm:$0xf]
      %v298 = vld [vmem:[%s244 + $0x68] sm:$0xf]
      %v299 = vld [vmem:[%s244 + $0x6c] sm:$0xf]
      %v300 = vld [vmem:[%s244 + $0x70] sm:$0xf]
      %v301 = vld [vmem:[%s244 + $0x74] sm:$0xf]
      %v302 = vld [vmem:[%s244 + $0x78] sm:$0xf]
      %v303 = vld [vmem:[%s244 + $0x7c] sm:$0xf]
      %v304 = vld [vmem:[%s249] sm:$0xf]
      %v305 = vld [vmem:[%s249 + $0x4] sm:$0xf]
      %v306 = vld [vmem:[%s249 + $0x8] sm:$0xf]
      %v307 = vld [vmem:[%s249 + $0xc] sm:$0xf]
      %v308 = vld [vmem:[%s249 + $0x10] sm:$0xf]
      %v309 = vld [vmem:[%s249 + $0x14] sm:$0xf]
      %v310 = vld [vmem:[%s249 + $0x18] sm:$0xf]
      %v311 = vld [vmem:[%s249 + $0x1c] sm:$0xf]
      %v312 = vld [vmem:[%s249 + $0x20] sm:$0xf]
      %v313 = vld [vmem:[%s249 + $0x24] sm:$0xf]
      %v314 = vld [vmem:[%s249 + $0x28] sm:$0xf]
      %v315 = vld [vmem:[%s249 + $0x2c] sm:$0xf]
      %v316 = vld [vmem:[%s249 + $0x30] sm:$0xf]
      %v317 = vld [vmem:[%s249 + $0x34] sm:$0xf]
      %v318 = vld [vmem:[%s249 + $0x38] sm:$0xf]
      %v319 = vld [vmem:[%s249 + $0x3c] sm:$0xf]
      %v352 = vunpack.c.l.b16 %v272
      %v353 = vunpack.c.l.b16 %v273
      %v354 = vunpack.c.l.b16 %v274
      %v355 = vunpack.c.l.b16 %v275
      %v356 = vunpack.c.l.b16 %v276
      %v357 = vunpack.c.l.b16 %v277
      %v358 = vunpack.c.l.b16 %v278
      %v359 = vunpack.c.l.b16 %v279
      %v360 = vunpack.c.l.b16 %v280
      %v361 = vunpack.c.l.b16 %v281
      %v362 = vunpack.c.l.b16 %v282
      %v363 = vunpack.c.l.b16 %v283
      %v364 = vunpack.c.l.b16 %v284
      %v365 = vunpack.c.l.b16 %v285
      %v366 = vunpack.c.l.b16 %v286
      %v367 = vunpack.c.l.b16 %v287
      %v368 = vunpack.c.l.b16 %v288
      %v369 = vunpack.c.l.b16 %v289
      %v370 = vunpack.c.l.b16 %v290
      %v371 = vunpack.c.l.b16 %v291
      %v372 = vunpack.c.l.b16 %v292
      %v373 = vunpack.c.l.b16 %v293
      %v374 = vunpack.c.l.b16 %v294
      %v375 = vunpack.c.l.b16 %v295
      %v376 = vunpack.c.l.b16 %v296
      %v377 = vunpack.c.l.b16 %v297
      %v378 = vunpack.c.l.b16 %v298
      %v379 = vunpack.c.l.b16 %v299
      %v380 = vunpack.c.l.b16 %v300
      %v381 = vunpack.c.l.b16 %v301
      %v382 = vunpack.c.l.b16 %v302
      %v383 = vunpack.c.l.b16 %v303
      %v384 = vpack.c.b16 %v353, %v352
      %v385 = vpack.c.b16 %v355, %v354
      %v386 = vpack.c.b16 %v357, %v356
      %v387 = vpack.c.b16 %v359, %v358
      %v388 = vpack.c.b16 %v361, %v360
      %v389 = vpack.c.b16 %v363, %v362
      %v390 = vpack.c.b16 %v365, %v364
      %v391 = vpack.c.b16 %v367, %v366
      %v392 = vpack.c.b16 %v369, %v368
      %v393 = vpack.c.b16 %v371, %v370
      %v394 = vpack.c.b16 %v373, %v372
      %v395 = vpack.c.b16 %v375, %v374
      %v396 = vpack.c.b16 %v377, %v376
      %v397 = vpack.c.b16 %v379, %v378
      %v398 = vpack.c.b16 %v381, %v380
      %v399 = vpack.c.b16 %v383, %v382
      %v432 = vunpack.c.l.b16 %v304
      %v433 = vunpack.c.l.b16 %v305
      %v434 = vunpack.c.l.b16 %v306
      %v435 = vunpack.c.l.b16 %v307
      %v436 = vunpack.c.l.b16 %v308
      %v437 = vunpack.c.l.b16 %v309
      %v438 = vunpack.c.l.b16 %v310
      %v439 = vunpack.c.l.b16 %v311
      %v440 = vunpack.c.l.b16 %v312
      %v441 = vunpack.c.l.b16 %v313
      %v442 = vunpack.c.l.b16 %v314
      %v443 = vunpack.c.l.b16 %v315
      %v444 = vunpack.c.l.b16 %v316
      %v445 = vunpack.c.l.b16 %v317
      %v446 = vunpack.c.l.b16 %v318
      %v447 = vunpack.c.l.b16 %v319
      %v448 = vpack.c.b16 %v433, %v432
      %v449 = vpack.c.b16 %v435, %v434
      %v450 = vpack.c.b16 %v437, %v436
      %v451 = vpack.c.b16 %v439, %v438
      %v452 = vpack.c.b16 %v441, %v440
      %v453 = vpack.c.b16 %v443, %v442
      %v454 = vpack.c.b16 %v445, %v444
      %v455 = vpack.c.b16 %v447, %v446
      %464 = vmatprep.subr.bf16.mxu0 0
      %465 = vmatpush1.bf16.msra.mxu0 %v448
      %466 = vmatprep.subr.bf16.mxu0 0
      %467 = vmatpush1.bf16.msra.mxu0 %v449
      %468 = vmatprep.subr.bf16.mxu0 0
      %469 = vmatpush1.bf16.msra.mxu0 %v450
      %470 = vmatprep.subr.bf16.mxu0 0
      %471 = vmatpush1.bf16.msra.mxu0 %v451
      %472 = vmatprep.subr.bf16.mxu0 0
      %473 = vmatpush1.bf16.msra.mxu0 %v452
      %474 = vmatprep.subr.bf16.mxu0 0
      %475 = vmatpush1.bf16.msra.mxu0 %v453
      %476 = vmatprep.subr.bf16.mxu0 0
      %477 = vmatpush1.bf16.msra.mxu0 %v454
      %478 = vmatprep.subr.bf16.mxu0 0
      %479 = vmatpush1.bf16.msra.mxu0 %v455
      %480 = vmatprep.subr.bf16.mxu0 0
      %481 = vmatpush1.bf16.msra.mxu0 0
      %482 = vmatprep.subr.bf16.mxu0 0
      %483 = vmatpush1.bf16.msra.mxu0 0
      %484 = vmatprep.subr.bf16.mxu0 0
      %485 = vmatpush1.bf16.msra.mxu0 0
      %486 = vmatprep.subr.bf16.mxu0 0
      %487 = vmatpush1.bf16.msra.mxu0 0
      %488 = vmatprep.subr.bf16.mxu0 0
      %489 = vmatpush1.bf16.msra.mxu0 0
      %490 = vmatprep.subr.bf16.mxu0 0
      %491 = vmatpush1.bf16.msra.mxu0 0
      %492 = vmatprep.subr.bf16.mxu0 0
      %493 = vmatpush1.bf16.msra.mxu0 0
      %494 = vmatprep.subr.bf16.mxu0 0
      %495 = vmatpush1.bf16.msra.mxu0 0
      %496 = vmatprep.mubr.bf16.mxu0 0
      %497 = vmatmul.mubr.bf16.gmra.mrb[0].mxu0 %v384
      %v498 = vpop.f32.mrb[0].mxu0
      %v499 = vadd.f32 0.0, %v498
      %v500 = vpop.f32.mrb[0].mxu0
      %v501 = vpop.f32.mrb[0].mxu0
      %v502 = vadd.f32 0.0, %v501
      %v503 = vpop.f32.mrb[0].mxu0
      %504 = vmatprep.mubr.bf16.mxu0 0
      %505 = vmatmul.mubr.bf16.gmra.mrb[0].mxu0 %v385
      %v506 = vpop.f32.mrb[0].mxu0
      %v507 = vadd.f32 0.0, %v506
      %v508 = vpop.f32.mrb[0].mxu0
      %v509 = vpop.f32.mrb[0].mxu0
      %v510 = vadd.f32 0.0, %v509
      %v511 = vpop.f32.mrb[0].mxu0
      %512 = vmatprep.mubr.bf16.mxu0 0
      %513 = vmatmul.mubr.bf16.gmra.mrb[0].mxu0 %v386
      %v514 = vpop.f32.mrb[0].mxu0
      %v515 = vadd.f32 0.0, %v514
      %v516 = vpop.f32.mrb[0].mxu0
      %v517 = vpop.f32.mrb[0].mxu0
      %v518 = vadd.f32 0.0, %v517
      %v519 = vpop.f32.mrb[0].mxu0
      %520 = vmatprep.mubr.bf16.mxu0 0
      %521 = vmatmul.mubr.bf16.gmra.mrb[0].mxu0 %v387
      %v522 = vpop.f32.mrb[0].mxu0
      %v523 = vadd.f32 0.0, %v522
      %v524 = vpop.f32.mrb[0].mxu0
      %v525 = vpop.f32.mrb[0].mxu0
      %v526 = vadd.f32 0.0, %v525
      %v527 = vpop.f32.mrb[0].mxu0
      %528 = vmatprep.mubr.bf16.mxu0 0
      %529 = vmatmul.mubr.bf16.gmra.mrb[0].mxu0 %v388
      %v530 = vpop.f32.mrb[0].mxu0
      %v531 = vadd.f32 0.0, %v530
      %v532 = vpop.f32.mrb[0].mxu0
      %v533 = vpop.f32.mrb[0].mxu0
      %v534 = vadd.f32 0.0, %v533
      %v535 = vpop.f32.mrb[0].mxu0
      %536 = vmatprep.mubr.bf16.mxu0 0
      %537 = vmatmul.mubr.bf16.gmra.mrb[0].mxu0 %v389
      %v538 = vpop.f32.mrb[0].mxu0
      %v539 = vadd.f32 0.0, %v538
      %v540 = vpop.f32.mrb[0].mxu0
      %v541 = vpop.f32.mrb[0].mxu0
      %v542 = vadd.f32 0.0, %v541
      %v543 = vpop.f32.mrb[0].mxu0
      %544 = vmatprep.mubr.bf16.mxu0 0
      %545 = vmatmul.mubr.bf16.gmra.mrb[0].mxu0 %v390
      %v546 = vpop.f32.mrb[0].mxu0
      %v547 = vadd.f32 0.0, %v546
      %v548 = vpop.f32.mrb[0].mxu0
      %v549 = vpop.f32.mrb[0].mxu0
      %v550 = vadd.f32 0.0, %v549
      %v551 = vpop.f32.mrb[0].mxu0
      %552 = vmatprep.mubr.bf16.mxu0 0
      %553 = vmatmul.mubr.bf16.gmra.mrb[0].mxu0 %v391
      %v554 = vpop.f32.mrb[0].mxu0
      %v555 = vadd.f32 0.0, %v554
      %v556 = vpop.f32.mrb[0].mxu0
      %v557 = vpop.f32.mrb[0].mxu0
      %v558 = vadd.f32 0.0, %v557
      %v559 = vpop.f32.mrb[0].mxu0
      %560 = vmatprep.mubr.bf16.mxu0 0
      %561 = vmatmul.mubr.bf16.gmra.mrb[0].mxu0 %v392
      %v562 = vpop.f32.mrb[0].mxu0
      %v563 = vadd.f32 0.0, %v562
      %v564 = vpop.f32.mrb[0].mxu0
      %v565 = vpop.f32.mrb[0].mxu0
      %v566 = vadd.f32 0.0, %v565
      %v567 = vpop.f32.mrb[0].mxu0
      %568 = vmatprep.mubr.bf16.mxu0 0
      %569 = vmatmul.mubr.bf16.gmra.mrb[0].mxu0 %v393
      %v570 = vpop.f32.mrb[0].mxu0
      %v571 = vadd.f32 0.0, %v570
      %v572 = vpop.f32.mrb[0].mxu0
      %v573 = vpop.f32.mrb[0].mxu0
      %v574 = vadd.f32 0.0, %v573
      %v575 = vpop.f32.mrb[0].mxu0
      %576 = vmatprep.mubr.bf16.mxu0 0
      %577 = vmatmul.mubr.bf16.gmra.mrb[0].mxu0 %v394
      %v578 = vpop.f32.mrb[0].mxu0
      %v579 = vadd.f32 0.0, %v578
      %v580 = vpop.f32.mrb[0].mxu0
      %v581 = vpop.f32.mrb[0].mxu0
      %v582 = vadd.f32 0.0, %v581
      %v583 = vpop.f32.mrb[0].mxu0
      %584 = vmatprep.mubr.bf16.mxu0 0
      %585 = vmatmul.mubr.bf16.gmra.mrb[0].mxu0 %v395
      %v586 = vpop.f32.mrb[0].mxu0
      %v587 = vadd.f32 0.0, %v586
      %v588 = vpop.f32.mrb[0].mxu0
      %v589 = vpop.f32.mrb[0].mxu0
      %v590 = vadd.f32 0.0, %v589
      %v591 = vpop.f32.mrb[0].mxu0
      %592 = vmatprep.mubr.bf16.mxu0 0
      %593 = vmatmul.mubr.bf16.gmra.mrb[0].mxu0 %v396
      %v594 = vpop.f32.mrb[0].mxu0
      %v595 = vadd.f32 0.0, %v594
      %v596 = vpop.f32.mrb[0].mxu0
      %v597 = vpop.f32.mrb[0].mxu0
      %v598 = vadd.f32 0.0, %v597
      %v599 = vpop.f32.mrb[0].mxu0
      %600 = vmatprep.mubr.bf16.mxu0 0
      %601 = vmatmul.mubr.bf16.gmra.mrb[0].mxu0 %v397
      %v602 = vpop.f32.mrb[0].mxu0
      %v603 = vadd.f32 0.0, %v602
      %v604 = vpop.f32.mrb[0].mxu0
      %v605 = vpop.f32.mrb[0].mxu0
      %v606 = vadd.f32 0.0, %v605
      %v607 = vpop.f32.mrb[0].mxu0
      %608 = vmatprep.mubr.bf16.mxu0 0
      %609 = vmatmul.mubr.bf16.gmra.mrb[0].mxu0 %v398
      %v610 = vpop.f32.mrb[0].mxu0
      %v611 = vadd.f32 0.0, %v610
      %v612 = vpop.f32.mrb[0].mxu0
      %v613 = vpop.f32.mrb[0].mxu0
      %v614 = vadd.f32 0.0, %v613
      %v615 = vpop.f32.mrb[0].mxu0
      %616 = vmatprep.mubr.bf16.mxu0 0
      %617 = vmatmul.mubr.bf16.gmra.mrb[0].mxu0 %v399
      %v618 = vpop.f32.mrb[0].mxu0
      %v619 = vadd.f32 0.0, %v618
      %v620 = vpop.f32.mrb[0].mxu0
      %v621 = vpop.f32.mrb[0].mxu0
      %v622 = vadd.f32 0.0, %v621
      %v623 = vpop.f32.mrb[0].mxu0
      %624 = vdwg.mxu0
      %v625 = vpack.c.bf16 %v502, %v499
      %v626 = vpack.c.bf16 %v510, %v507
      %v627 = vpack.c.bf16 %v518, %v515
      %v628 = vpack.c.bf16 %v526, %v523
      %v629 = vpack.c.bf16 %v534, %v531
      %v630 = vpack.c.bf16 %v542, %v539
      %v631 = vpack.c.bf16 %v550, %v547
      %v632 = vpack.c.bf16 %v558, %v555
      %v633 = vpack.c.bf16 %v566, %v563
      %v634 = vpack.c.bf16 %v574, %v571
      %v635 = vpack.c.bf16 %v582, %v579
      %v636 = vpack.c.bf16 %v590, %v587
      %v637 = vpack.c.bf16 %v598, %v595
      %v638 = vpack.c.bf16 %v606, %v603
      %v639 = vpack.c.bf16 %v614, %v611
      %v640 = vpack.c.bf16 %v622, %v619
      %v657 = vunpack.c.l.b16 %v625
      %v658 = vunpack.c.h.b16 %v625
      %v659 = vunpack.c.l.b16 %v626
      %v660 = vunpack.c.h.b16 %v626
      %v661 = vunpack.c.l.b16 %v627
      %v662 = vunpack.c.h.b16 %v627
      %v663 = vunpack.c.l.b16 %v628
      %v664 = vunpack.c.h.b16 %v628
      %v665 = vunpack.c.l.b16 %v629
      %v666 = vunpack.c.h.b16 %v629
      %v667 = vunpack.c.l.b16 %v630
      %v668 = vunpack.c.h.b16 %v630
      %v669 = vunpack.c.l.b16 %v631
      %v670 = vunpack.c.h.b16 %v631
      %v671 = vunpack.c.l.b16 %v632
      %v672 = vunpack.c.h.b16 %v632
      %v673 = vunpack.c.l.b16 %v633
      %v674 = vunpack.c.h.b16 %v633
      %v675 = vunpack.c.l.b16 %v634
      %v676 = vunpack.c.h.b16 %v634
      %v677 = vunpack.c.l.b16 %v635
      %v678 = vunpack.c.h.b16 %v635
      %v679 = vunpack.c.l.b16 %v636
      %v680 = vunpack.c.h.b16 %v636
      %v681 = vunpack.c.l.b16 %v637
      %v682 = vunpack.c.h.b16 %v637
      %v683 = vunpack.c.l.b16 %v638
      %v684 = vunpack.c.h.b16 %v638
      %v685 = vunpack.c.l.b16 %v639
      %v686 = vunpack.c.h.b16 %v639
      %v687 = vunpack.c.l.b16 %v640
      %v688 = vunpack.c.h.b16 %v640
      %v689 = vpack.c.b16 %v657, %v657
      %v690 = vpack.c.b16 %v658, %v658
      %v691 = vpack.c.b16 %v659, %v659
      %v692 = vpack.c.b16 %v660, %v660
      %v693 = vpack.c.b16 %v661, %v661
      %v694 = vpack.c.b16 %v662, %v662
      %v695 = vpack.c.b16 %v663, %v663
      %v696 = vpack.c.b16 %v664, %v664
      %v697 = vpack.c.b16 %v665, %v665
      %v698 = vpack.c.b16 %v666, %v666
      %v699 = vpack.c.b16 %v667, %v667
      %v700 = vpack.c.b16 %v668, %v668
      %v701 = vpack.c.b16 %v669, %v669
      %v702 = vpack.c.b16 %v670, %v670
      %v703 = vpack.c.b16 %v671, %v671
      %v704 = vpack.c.b16 %v672, %v672
      %v705 = vpack.c.b16 %v673, %v673
      %v706 = vpack.c.b16 %v674, %v674
      %v707 = vpack.c.b16 %v675, %v675
      %v708 = vpack.c.b16 %v676, %v676
      %v709 = vpack.c.b16 %v677, %v677
      %v710 = vpack.c.b16 %v678, %v678
      %v711 = vpack.c.b16 %v679, %v679
      %v712 = vpack.c.b16 %v680, %v680
      %v713 = vpack.c.b16 %v681, %v681
      %v714 = vpack.c.b16 %v682, %v682
      %v715 = vpack.c.b16 %v683, %v683
      %v716 = vpack.c.b16 %v684, %v684
      %v717 = vpack.c.b16 %v685, %v685
      %v718 = vpack.c.b16 %v686, %v686
      %v719 = vpack.c.b16 %v687, %v687
      %v720 = vpack.c.b16 %v688, %v688
      %753 = vst [vmem:[%s257] sm:$0xf] %v689
      %754 = vst [vmem:[%s257 + $0x4] sm:$0xf] %v690
      %755 = vst [vmem:[%s257 + $0x8] sm:$0xf] %v691
      %756 = vst [vmem:[%s257 + $0xc] sm:$0xf] %v692
      %757 = vst [vmem:[%s257 + $0x10] sm:$0xf] %v693
      %758 = vst [vmem:[%s257 + $0x14] sm:$0xf] %v694
      %759 = vst [vmem:[%s257 + $0x18] sm:$0xf] %v695
      %760 = vst [vmem:[%s257 + $0x1c] sm:$0xf] %v696
      %761 = vst [vmem:[%s257 + $0x20] sm:$0xf] %v697
      %762 = vst [vmem:[%s257 + $0x24] sm:$0xf] %v698
      %763 = vst [vmem:[%s257 + $0x28] sm:$0xf] %v699
      %764 = vst [vmem:[%s257 + $0x2c] sm:$0xf] %v700
      %765 = vst [vmem:[%s257 + $0x30] sm:$0xf] %v701
      %766 = vst [vmem:[%s257 + $0x34] sm:$0xf] %v702
      %767 = vst [vmem:[%s257 + $0x38] sm:$0xf] %v703
      %768 = vst [vmem:[%s257 + $0x3c] sm:$0xf] %v704
      %769 = vst [vmem:[%s257 + $0x40] sm:$0xf] %v705
      %770 = vst [vmem:[%s257 + $0x44] sm:$0xf] %v706
      %771 = vst [vmem:[%s257 + $0x48] sm:$0xf] %v707
      %772 = vst [vmem:[%s257 + $0x4c] sm:$0xf] %v708
      %773 = vst [vmem:[%s257 + $0x50] sm:$0xf] %v709
      %774 = vst [vmem:[%s257 + $0x54] sm:$0xf] %v710
      %775 = vst [vmem:[%s257 + $0x58] sm:$0xf] %v711
      %776 = vst [vmem:[%s257 + $0x5c] sm:$0xf] %v712
      %777 = vst [vmem:[%s257 + $0x60] sm:$0xf] %v713
      %778 = vst [vmem:[%s257 + $0x64] sm:$0xf] %v714
      %779 = vst [vmem:[%s257 + $0x68] sm:$0xf] %v715
      %780 = vst [vmem:[%s257 + $0x6c] sm:$0xf] %v716
      %781 = vst [vmem:[%s257 + $0x70] sm:$0xf] %v717
      %782 = vst [vmem:[%s257 + $0x74] sm:$0xf] %v718
      %783 = vst [vmem:[%s257 + $0x78] sm:$0xf] %v719
      %784 = vst [vmem:[%s257 + $0x7c] sm:$0xf] %v720
      %v785 = vadd.f32 %v499, %v502
      %v786 = vadd.f32 %v785, %v507
      %v787 = vadd.f32 %v786, %v510
      %v788 = vadd.f32 %v787, %v515
      %v789 = vadd.f32 %v788, %v518
      %v790 = vadd.f32 %v789, %v523
      %v791 = vadd.f32 %v790, %v526
      %v792 = vadd.f32 %v791, %v531
      %v793 = vadd.f32 %v792, %v534
      %v794 = vadd.f32 %v793, %v539
      %v795 = vadd.f32 %v794, %v542
      %v796 = vadd.f32 %v795, %v547
      %v797 = vadd.f32 %v796, %v550
      %v798 = vadd.f32 %v797, %v555
      %v799 = vadd.f32 %v798, %v558
      %v800 = vadd.f32 %v799, %v563
      %v801 = vadd.f32 %v800, %v566
      %v802 = vadd.f32 %v801, %v571
      %v803 = vadd.f32 %v802, %v574
      %v804 = vadd.f32 %v803, %v579
      %v805 = vadd.f32 %v804, %v582
      %v806 = vadd.f32 %v805, %v587
      %v807 = vadd.f32 %v806, %v590
      %v808 = vadd.f32 %v807, %v595
      %v809 = vadd.f32 %v808, %v598
      %v810 = vadd.f32 %v809, %v603
      %v811 = vadd.f32 %v810, %v606
      %v812 = vadd.f32 %v811, %v611
      %v813 = vadd.f32 %v812, %v614
      %v814 = vadd.f32 %v813, %v619
      %v815 = vadd.f32 %v814, %v622
      %v816 = vrot.slane %v815, 4
      %v817 = vadd.f32 %v815, %v816
      %v818 = vrot.slane %v817, 2
      %v819 = vadd.f32 %v817, %v818
      %v820 = vrot.slane %v819, 1
      %v821 = vadd.f32 %v819, %v820
      %822 = vst [vmem:[%s264] sm:$0x1] %v821
      %v823 = vmul.f32 %v499, %v499
      %v824 = vmul.f32 %v502, %v502
      %v825 = vmul.f32 %v507, %v507
      %v826 = vmul.f32 %v510, %v510
      %v827 = vmul.f32 %v515, %v515
      %v828 = vmul.f32 %v518, %v518
      %v829 = vmul.f32 %v523, %v523
      %v830 = vmul.f32 %v526, %v526
      %v831 = vmul.f32 %v531, %v531
      %v832 = vmul.f32 %v534, %v534
      %v833 = vmul.f32 %v539, %v539
      %v834 = vmul.f32 %v542, %v542
      %v835 = vmul.f32 %v547, %v547
      %v836 = vmul.f32 %v550, %v550
      %v837 = vmul.f32 %v555, %v555
      %v838 = vmul.f32 %v558, %v558
      %v839 = vmul.f32 %v563, %v563
      %v840 = vmul.f32 %v566, %v566
      %v841 = vmul.f32 %v571, %v571
      %v842 = vmul.f32 %v574, %v574
      %v843 = vmul.f32 %v579, %v579
      %v844 = vmul.f32 %v582, %v582
      %v845 = vmul.f32 %v587, %v587
      %v846 = vmul.f32 %v590, %v590
      %v847 = vmul.f32 %v595, %v595
      %v848 = vmul.f32 %v598, %v598
      %v849 = vmul.f32 %v603, %v603
      %v850 = vmul.f32 %v606, %v606
      %v851 = vmul.f32 %v611, %v611
      %v852 = vmul.f32 %v614, %v614
      %v853 = vmul.f32 %v619, %v619
      %v854 = vmul.f32 %v622, %v622
      %v855 = vadd.f32 %v823, %v824
      %v856 = vadd.f32 %v855, %v825
      %v857 = vadd.f32 %v856, %v826
      %v858 = vadd.f32 %v857, %v827
      %v859 = vadd.f32 %v858, %v828
      %v860 = vadd.f32 %v859, %v829
      %v861 = vadd.f32 %v860, %v830
      %v862 = vadd.f32 %v861, %v831
      %v863 = vadd.f32 %v862, %v832
      %v864 = vadd.f32 %v863, %v833
      %v865 = vadd.f32 %v864, %v834
      %v866 = vadd.f32 %v865, %v835
      %v867 = vadd.f32 %v866, %v836
      %v868 = vadd.f32 %v867, %v837
      %v869 = vadd.f32 %v868, %v838
      %v870 = vadd.f32 %v869, %v839
      %v871 = vadd.f32 %v870, %v840
      %v872 = vadd.f32 %v871, %v841
      %v873 = vadd.f32 %v872, %v842
      %v874 = vadd.f32 %v873, %v843
      %v875 = vadd.f32 %v874, %v844
      %v876 = vadd.f32 %v875, %v845
      %v877 = vadd.f32 %v876, %v846
      %v878 = vadd.f32 %v877, %v847
      %v879 = vadd.f32 %v878, %v848
      %v880 = vadd.f32 %v879, %v849
      %v881 = vadd.f32 %v880, %v850
      %v882 = vadd.f32 %v881, %v851
      %v883 = vadd.f32 %v882, %v852
      %v884 = vadd.f32 %v883, %v853
      %v885 = vadd.f32 %v884, %v854
      %v886 = vrot.slane %v885, 4
      %v887 = vadd.f32 %v885, %v886
      %v888 = vrot.slane %v887, 2
      %v889 = vadd.f32 %v887, %v888
      %v890 = vrot.slane %v889, 1
      %v891 = vadd.f32 %v889, %v890
      %892 = vst [vmem:[%s270] sm:$0x1] %v891
      %s893 = smul.u32 32, %s20
      %p894 = scmp.lt.s32.totalorder %s893, 63
      %s895 = scalar_select %p894, %s893, 63
      %p896 = scmp.lt.s32.totalorder %s21, 0
      %s897 = scalar_select %p896, %s21, 0
      %s898 = sadd.s32 %s897, %s895
      %s899 = smul.addr %s898, 4
      %s900 = scalar_lea.vmem %s2, %s899
      %p901 = scmp.lt.s32.totalorder %s20, 1
      %s902 = scalar_select %p901, %s20, 1
      %p903 = scmp.lt.s32.totalorder %s21, 0
      %s904 = scalar_select %p903, %s21, 0
      %s905 = sadd.s32 %s904, %s902
      %s906 = scalar_lea.vmem %s3, %s905
      %p907 = scmp.lt.s32.totalorder %s20, 1
      %s908 = scalar_select %p907, %s20, 1
      %p909 = scmp.lt.s32.totalorder %s21, 0
      %s910 = scalar_select %p909, %s21, 0
      %s911 = sadd.s32 %s910, %s908
      %s912 = scalar_lea.vmem %s4, %s911
      // Predicated region
      $region29: #{conv_block_forward.2} parent=27 // pred_check
        %p913 = pneg %p100
      $region30: #{conv_block_forward.2} parent=27 // pred_check_branch
        %915 = sbr.rel (%p913) target = $region32
      $region31: #{conv_block_forward.2} parent=27 // pred_region
        %s916 = smul.u32 32, %s20
      $region32: #{conv_block_forward.2} parent=27 // pred_fallthru
        _
      // Predicated region
      $region33: #{conv_block_forward.2} parent=27 // pred_check
        %p917 = pneg %p128
      $region34: #{conv_block_forward.2} parent=27 // pred_check_branch
        %919 = sbr.rel (%p917) target = $region36
      $region35: #{conv_block_forward.2} parent=27 // pred_region
        _
      $region36: #{conv_block_forward.2} parent=27 // pred_fallthru
        _
      // Predicated region
      $region37: #{conv_block_forward.2} parent=27 // pred_check
        %p920 = pneg %p156
      $region38: #{conv_block_forward.2} parent=27 // pred_check_branch
        %922 = sbr.rel (%p920) target = $region40
      $region39: #{conv_block_forward.2} parent=27 // pred_region
        _
      $region40: #{conv_block_forward.2} parent=27 // pred_fallthru
        _
    $region28: #{conv_block_forward.2} parent=5 // pred_fallthru
      _
    %p923 = scmp.le.s32.totalorder 2, %s11
    // Predicated region
    $region41: #{conv_block_forward.2} parent=5 // pred_check
      %p924 = pneg %p923
    $region42: #{conv_block_forward.2} parent=5 // pred_check_branch
      %926 = sbr.rel (%p924) target = $region44
    $region43: #{conv_block_forward.2} parent=5 // pred_region
      %s927 = ssub.s32 %s11, 2
      // Predicated region
      $region45: #{conv_block_forward.2} parent=43 // pred_check
        %p928 = pneg %p106
      $region46: #{conv_block_forward.2} parent=43 // pred_check_branch
        %930 = sbr.rel (%p928) target = $region48
      $region47: #{conv_block_forward.2} parent=43 // pred_region
        %s931 = smul.u32 32, %s22
        %p932 = scmp.lt.s32.totalorder %s931, 63
        %s933 = scalar_select %p932, %s931, 63
        %p934 = scmp.lt.s32.totalorder %s23, 0
        %s935 = scalar_select %p934, %s23, 0
        %s936 = sadd.s32 %s935, %s933
        %s937 = smul.addr %s936, 4
        %s938 = scalar_lea.vmem %s2, %s937
      $region48: #{conv_block_forward.2} parent=43 // pred_fallthru
        _
      // Predicated region
      $region49: #{conv_block_forward.2} parent=43 // pred_check
        %p939 = pneg %p134
      $region50: #{conv_block_forward.2} parent=43 // pred_check_branch
        %941 = sbr.rel (%p939) target = $region52
      $region51: #{conv_block_forward.2} parent=43 // pred_region
        %p942 = scmp.lt.s32.totalorder %s22, 1
        %s943 = scalar_select %p942, %s22, 1
        %p944 = scmp.lt.s32.totalorder %s23, 0
        %s945 = scalar_select %p944, %s23, 0
        %s946 = sadd.s32 %s945, %s943
        %s947 = scalar_lea.vmem %s3, %s946
      $region52: #{conv_block_forward.2} parent=43 // pred_fallthru
        _
      // Predicated region
      $region53: #{conv_block_forward.2} parent=43 // pred_check
        %p948 = pneg %p162
      $region54: #{conv_block_forward.2} parent=43 // pred_check_branch
        %950 = sbr.rel (%p948) target = $region56
      $region55: #{conv_block_forward.2} parent=43 // pred_region
        %p951 = scmp.lt.s32.totalorder %s22, 1
        %s952 = scalar_select %p951, %s22, 1
        %p953 = scmp.lt.s32.totalorder %s23, 0
        %s954 = scalar_select %p953, %s23, 0
        %s955 = sadd.s32 %s954, %s952
        %s956 = scalar_lea.vmem %s4, %s955
      $region56: #{conv_block_forward.2} parent=43 // pred_fallthru
        _
    $region44: #{conv_block_forward.2} parent=5 // pred_fallthru
      _
  $region6: #{conv_block_forward.2} parent=0 // loop_footer
    %s15 = sadd.s32 1, %s11
  $region7: #{conv_block_forward.2} parent=0 // loop_footer_branch
    %10 = sbr.rel target = $region3
  $region8: #{conv_block_forward.2} parent=0 // loop_exit
    _

</llo_original>
